<compile_context>
chip_gen: v5e
topology: v5e:2x2
jax: 0.10.0
libtpu: 0.0.40
codegen_flags: <defaults>
</compile_context>

<pallas_src>
import functools

import jax
import jax.numpy as jnp
from jax import lax
from jax.experimental import pallas as pl
from jax.experimental.pallas import tpu as pltpu


def _center_loss_kernel(num_gt_ref,            # scalar prefetch, SMEM (B,) int32
                        heat_ref, gtheat_ref,  # VMEM (TC, H, W)  bf16/f32 (batch squeezed)
                        regt_ref,              # VMEM (W, 4*H)    f32 [off_x,off_y,wh_w,wh_h]
                        gt_ref,                # VMEM (Nmax, 6)   f32 [icx,icy,fx,fy,w,h]
                        out_ref,               # VMEM (1, 1)      f32 per-image loss
                        sum_sc, npos_sc,       # VMEM (1, 1)      f32 accumulators
                        *, poly_dtype):
    i = pl.program_id(0)
    c = pl.program_id(1)
    nc = pl.num_programs(1)
    TC, H, W = heat_ref.shape
    Nmax = gt_ref.shape[0]
    eps = 1e-6

    # ---------- init accumulators at the first channel tile of this image ----------
    @pl.when(c == 0)
    def _():
        sum_sc[...] = jnp.zeros_like(sum_sc)
        npos_sc[...] = jnp.zeros_like(npos_sc)

    # ---------- focal loss: fused elementwise pass over this channel tile ----------
    heat2 = heat_ref[...].reshape(TC * H, W)
    gth2 = gtheat_ref[...].reshape(TC * H, W)
    pred32 = jnp.clip(heat2.astype(jnp.float32), eps, 1.0 - eps)   # keep logs finite (bf16==1.0)
    pos = gth2 >= 1.0
    # Polynomial weights in poly_dtype (bf16 packs 2 elems/lane on v6e/v7x VALUs);
    # transcendentals and reductions stay f32.
    p = heat2.astype(poly_dtype)
    g = gth2.astype(poly_dtype)
    w_pos = jnp.square(1.0 - p).astype(jnp.float32)
    w_neg = (jnp.square(jnp.square(1.0 - g)) * jnp.square(p)).astype(jnp.float32)
    loss_map = jnp.where(pos,
                         jnp.log(pred32) * w_pos,
                         w_neg * jnp.log(1.0 - pred32))
    sum_sc[...] += jnp.sum(loss_map, keepdims=True)                 # (1, 1)
    npos_sc[...] += jnp.sum(pos.astype(jnp.float32), keepdims=True)  # (1, 1)

    # ---------- last channel tile: regression gather + combine, write per-image loss ----------
    @pl.when(c == nc - 1)
    def _():
        n = num_gt_ref[i]
        nf = n.astype(jnp.float32)

        npos = npos_sc[...]
        focal = -sum_sc[...] / jnp.where(npos > 0.0, npos, 1.0)     # (1, 1), exact division

        gt = gt_ref[...]                                            # (Nmax, 6)
        icx = gt[:, 0:1].astype(jnp.int32)
        icy = gt[:, 1:2].astype(jnp.int32)
        tgt = gt[:, 2:6]                                            # (Nmax, 4): fx, fy, w, h

        # Stage 1: gather columns with one (Nmax,W) x (W,4H) MXU matmul.
        w_iota = lax.broadcasted_iota(jnp.int32, (Nmax, W), 1)
        oh_w = (w_iota == icx).astype(jnp.float32)                  # (Nmax, W)
        cols = jnp.dot(oh_w, regt_ref[...],
                       preferred_element_type=jnp.float32)          # (Nmax, 4H)

        # Stage 2: select row icy inside each lane-contiguous H segment (no lane-splitting
        # reshape): tile the H one-hot by lane-concat, then a small (4H,4) selection matmul.
        h_iota = lax.broadcasted_iota(jnp.int32, (Nmax, H), 1)
        oh_h = (h_iota == icy).astype(jnp.float32)                  # (Nmax, H)
        oh_h4 = jnp.concatenate([oh_h, oh_h, oh_h, oh_h], axis=1)   # (Nmax, 4H)
        picked = cols * oh_h4
        k_iota = lax.broadcasted_iota(jnp.int32, (4 * H, 4), 0)
        c_iota = lax.broadcasted_iota(jnp.int32, (4 * H, 4), 1)
        sel = ((k_iota >= c_iota * H) & (k_iota < (c_iota + 1) * H)).astype(jnp.float32)
        gathered = jnp.dot(picked, sel,
                           preferred_element_type=jnp.float32)      # (Nmax, 4) = reg[:, icy, icx]

        valid = (lax.broadcasted_iota(jnp.int32, (Nmax, 4), 0) < n).astype(jnp.float32)
        # offset_loss + wh_loss == sum(|err|) / (2*n)  (L1 mean over n x 2 each)
        err_sum = jnp.sum(jnp.abs(gathered - tgt) * valid, keepdims=True)   # (1, 1)
        reg_loss = err_sum / jnp.maximum(2.0 * nf, 1.0)

        total = focal + reg_loss
        # images with zero GT boxes contribute 0 (the PyTorch `continue`)
        out_ref[...] = jnp.where(n > 0, total, jnp.zeros_like(total))


def _pick_channel_tile(C, H, W, itemsize, target_block_bytes=4 * 2**20):
    """Largest divisor of C whose (TC, H, W) heatmap block stays under the target size."""
    per_ch = max(1, H * W * itemsize)
    best = 1
    for tc in range(1, C + 1):
        if C % tc == 0 and tc * per_ch <= target_block_bytes:
            best = tc
    return best


def _vmem_limit_bytes(want):
    """Generation-aware scoped-VMEM limit: headroom below v7x's 64 MiB physical cap,
    allow up to ~100 MiB on 128 MiB chips (v5e/v6e)."""
    try:
        cap = int(pltpu.get_tpu_info().vmem_capacity_bytes)
    except Exception:
        cap = 128 * 2**20
    ceiling = cap - 16 * 2**20 if cap <= 64 * 2**20 else 100 * 2**20
    return int(max(16 * 2**20, min(ceiling, max(32 * 2**20, want))))


def center_loss(num_gt, pre_heat, gt_heat, pre_off, pre_wh, gts,
                *, poly_dtype=jnp.bfloat16):
    """CenterNet loss: mean over batch of (focal + offset L1 + wh L1).

    poly_dtype: dtype for the focal polynomial weights. bf16 (default) halves VALU work
    on v6e/v7x; pass jnp.float32 on v5e (no bf16 VALU).
    """
    B, C, H, W = pre_heat.shape
    Nmax = gts.shape[1]
    heat_itemsize = jnp.dtype(pre_heat.dtype).itemsize

    # ---- wrapper-side layout plumbing (once per call) ----
    # Stack the 4 regression channels lane-dense as (W, 4*H) so the in-kernel gather is
    # a single (Nmax,W) x (W,4H) MXU matmul.
    reg = jnp.concatenate([pre_off, pre_wh], axis=1).astype(jnp.float32)   # (B, 4, H, W)
    reg_t = jnp.transpose(reg.reshape(B, 4 * H, W), (0, 2, 1))             # (B, W, 4H)
    # Integer centers (PyTorch .long() truncation) + fractional offsets; clamp the integer
    # part so a boundary coordinate cannot silently zero-out the one-hot gather.
    cxcy = gts[..., :2].astype(jnp.float32)
    icxcy = jnp.trunc(cxcy)
    frac = cxcy - icxcy
    icx = jnp.clip(icxcy[..., 0:1], 0.0, float(W - 1))
    icy = jnp.clip(icxcy[..., 1:2], 0.0, float(H - 1))
    gt_aug = jnp.concatenate([icx, icy, frac, gts[..., 2:].astype(jnp.float32)],
                             axis=-1)                                      # (B, Nmax, 6)

    # ---- channel tiling: bounds per-step VMEM and lengthens the grid for pipelining ----
    tc = _pick_channel_tile(C, H, W, heat_itemsize)
    nc = C // tc

    heat_block = tc * H * W * heat_itemsize
    want = (2 * 2 * heat_block          # heat + gt_heat blocks, double-buffered
            + 2 * W * 4 * H * 4         # reg_t block
            + 4 * 2**20)                # gt/scratch/out blocks + compiler slack
    vmem_limit = _vmem_limit_bytes(want)

    grid_spec = pltpu.PrefetchScalarGridSpec(
        num_scalar_prefetch=1,
        grid=(B, nc),
        in_specs=[
            pl.BlockSpec((pl.Squeezed(), tc, H, W), lambda i, c, ng: (i, c, 0, 0)),
            pl.BlockSpec((pl.Squeezed(), tc, H, W), lambda i, c, ng: (i, c, 0, 0)),
            pl.BlockSpec((pl.Squeezed(), W, 4 * H), lambda i, c, ng: (i, 0, 0)),
            pl.BlockSpec((pl.Squeezed(), Nmax, 6), lambda i, c, ng: (i, 0, 0)),
        ],
        out_specs=pl.BlockSpec((pl.Squeezed(), 1, 1), lambda i, c, ng: (i, 0, 0)),
        scratch_shapes=[pltpu.VMEM((1, 1), jnp.float32),
                        pltpu.VMEM((1, 1), jnp.float32)],
    )

    cost = pl.CostEstimate(
        flops=int(B * C * H * W * 14 + B * 2 * Nmax * W * 4 * H),
        transcendentals=int(2 * B * C * H * W),
        bytes_accessed=int(B * (2 * C * H * W * heat_itemsize
                                + 4 * H * W * 4 + Nmax * 6 * 4 + 8)),
    )

    per_image = pl.pallas_call(
        functools.partial(_center_loss_kernel, poly_dtype=poly_dtype),
        out_shape=jax.ShapeDtypeStruct((B, 1, 1), jnp.float32),
        grid_spec=grid_spec,
        compiler_params=pltpu.CompilerParams(
            dimension_semantics=("parallel", "arbitrary"),
            vmem_limit_bytes=vmem_limit),
        cost_estimate=cost,
    )(num_gt.astype(jnp.int32), pre_heat, gt_heat, reg_t, gt_aug)
    return jnp.sum(per_image) / B               # loss /= batchsize


def reference_center_loss(num_gt, pre_heat, gt_heat, pre_off, pre_wh, gts):
    """Pure-JAX reference mirroring the PyTorch forward (same FLoss/LLoss assumptions)."""
    B = pre_heat.shape[0]
    eps = 1e-6
    total = jnp.float32(0.0)
    for i in range(B):
        n = int(num_gt[i])
        if n == 0:
            continue
        pred = jnp.clip(pre_heat[i].astype(jnp.float32), eps, 1.0 - eps)
        gth = gt_heat[i].astype(jnp.float32)
        pos = gth >= 1.0
        pos_loss = jnp.sum(jnp.where(pos, jnp.log(pred) * (1.0 - pred) ** 2, 0.0))
        neg_loss = jnp.sum(jnp.where(pos, 0.0,
                                     ((1.0 - gth) ** 4) * (pred ** 2) * jnp.log(1.0 - pred)))
        num_pos = jnp.sum(pos.astype(jnp.float32))
        focal = jnp.where(num_pos > 0.0,
                          -(pos_loss + neg_loss) / jnp.maximum(num_pos, 1.0),
                          -neg_loss)
        gt = gts[i, :n]
        cxcy = gt[:, :2]
        icxcy = cxcy.astype(jnp.int32)
        gt_off = cxcy - icxcy.astype(jnp.float32)
        gt_wh = gt[:, 2:]
        icx, icy = icxcy[:, 0], icxcy[:, 1]
        # permute(2,1,0) then [icx, icy, :]  ==  original [:, icy, icx]
        po = pre_off[i][:, icy, icx].T   # (n, 2)
        pw = pre_wh[i][:, icy, icx].T    # (n, 2)
        offset_loss = jnp.mean(jnp.abs(po - gt_off))
        wh_loss = jnp.mean(jnp.abs(pw - gt_wh))
        total = total + focal + offset_loss + wh_loss
    return total / B


if __name__ == "__main__":
    B, C, H, W, Nmax = 2, 4, 16, 16, 8
    key = jax.random.PRNGKey(0)
    k1, k2, k3, k4, k5, k6 = jax.random.split(key, 6)

    # deterministic synthetic "network outputs"
    pre_heat_f32 = jax.nn.sigmoid(jax.random.normal(k1, (B, C, H, W), jnp.float32))
    pre_off = jax.random.normal(k2, (B, 2, H, W), jnp.float32) * 0.5
    pre_wh = jax.random.uniform(k3, (B, 2, H, W), jnp.float32, minval=1.0, maxval=8.0)

    # deterministic synthetic "targets"
    num_gt_list = [3, 5]
    num_gt = jnp.array(num_gt_list, jnp.int32)
    cx = jax.random.uniform(k4, (B, Nmax, 1), jnp.float32, minval=0.0, maxval=W - 1e-2)
    cy = jax.random.uniform(k5, (B, Nmax, 1), jnp.float32, minval=0.0, maxval=H - 1e-2)
    bwh = jax.random.uniform(k6, (B, Nmax, 2), jnp.float32, minval=1.0, maxval=8.0)
    gts = jnp.concatenate([cx, cy, bwh], axis=-1)                    # (B, Nmax, 4)
    row = jnp.arange(Nmax)[None, :, None]
    gts = jnp.where(row < num_gt[:, None, None], gts, 0.0)           # zero pad rows

    gt_heat_f32 = jax.random.uniform(jax.random.fold_in(key, 11),
                                     (B, C, H, W), jnp.float32, minval=0.0, maxval=0.8)
    for i in range(B):
        for j in range(num_gt_list[i]):
            icx_ = int(gts[i, j, 0])
            icy_ = int(gts[i, j, 1])
            cls = j % C
            gt_heat_f32 = gt_heat_f32.at[i, cls, icy_, icx_].set(1.0)

    # Heatmaps are streamed to the kernel in bf16 (halves HBM traffic); the reference sees
    # the identical bf16-rounded values upcast to f32 so the comparison is apples-to-apples.
    pre_heat = pre_heat_f32.astype(jnp.bfloat16)
    gt_heat = gt_heat_f32.astype(jnp.bfloat16)

    loss = center_loss(num_gt, pre_heat, gt_heat, pre_off, pre_wh, gts)
    loss = jax.block_until_ready(loss)

    ref = reference_center_loss(num_gt, pre_heat.astype(jnp.float32),
                                gt_heat.astype(jnp.float32), pre_off, pre_wh, gts)
    ref = jax.block_until_ready(ref)

    # tolerance accounts for the bf16 polynomial focal weights inside the kernel
    assert abs(float(loss) - float(ref)) <= 2e-3 + 2e-3 * abs(float(ref)), (
        f"kernel {float(loss)} vs reference {float(ref)}")
    print("KERNEL_OK")
</pallas_src>

<mosaic_0001>
module attributes {stable_mosaic.version = 11 : i64} {
  func.func @_center_loss_kernel(%arg0: i32, %arg1: i32, %arg2: memref<2xi32, #tpu.memory_space<smem>>, %arg3: memref<1x4x16x16xbf16, #tpu.memory_space<vmem>>, %arg4: memref<1x4x16x16xbf16, #tpu.memory_space<vmem>>, %arg5: memref<1x16x64xf32, #tpu.memory_space<vmem>>, %arg6: memref<1x8x6xf32, #tpu.memory_space<vmem>>, %arg7: memref<1x1x1xf32, #tpu.memory_space<vmem>>, %arg8: memref<1x1xf32, #tpu.memory_space<vmem>>, %arg9: memref<1x1xf32, #tpu.memory_space<vmem>>) attributes {dimension_semantics = [#tpu.dimension_semantics<parallel>, #tpu.dimension_semantics<arbitrary>], iteration_bounds = array<i64: 2, 1>, scalar_prefetch = 1 : i64, scratch_operands = 2 : i64, tpu.core_type = #tpu.core_type<tc>, window_params = [{transform_indices = @transform_0, window_bounds = array<i64: 1, 4, 16, 16>}, {transform_indices = @transform_1, window_bounds = array<i64: 1, 4, 16, 16>}, {transform_indices = @transform_2, window_bounds = array<i64: 1, 16, 64>}, {transform_indices = @transform_3, window_bounds = array<i64: 1, 8, 6>}, {transform_indices = @transform_4, window_bounds = array<i64: 1, 1, 1>}]} {
    %c0_i32 = arith.constant 0 : i32
    %0 = arith.cmpi eq, %arg1, %c0_i32 : i32
    %1 = arith.extui %0 : i1 to i32
    %c0_i32_0 = arith.constant 0 : i32
    %2 = arith.cmpi ne, %1, %c0_i32_0 : i32
    scf.if %2 {
      %cst_25 = arith.constant 0.000000e+00 : f32
      %55 = vector.broadcast %cst_25 : f32 to vector<1x1xf32>
      %c0_26 = arith.constant 0 : index
      %c0_27 = arith.constant 0 : index
      %56 = vector.load %arg8[%c0_26, %c0_27] : memref<1x1xf32, #tpu.memory_space<vmem>>, vector<1x1xf32>
      tpu.vector_store %arg8[%c0_26, %c0_27], %55 {strides = array<i32>} : memref<1x1xf32, #tpu.memory_space<vmem>>, vector<1x1xf32>,
      %cst_28 = arith.constant 0.000000e+00 : f32
      %57 = vector.broadcast %cst_28 : f32 to vector<1x1xf32>
      %c0_29 = arith.constant 0 : index
      %c0_30 = arith.constant 0 : index
      %58 = vector.load %arg9[%c0_29, %c0_30] : memref<1x1xf32, #tpu.memory_space<vmem>>, vector<1x1xf32>
      tpu.vector_store %arg9[%c0_29, %c0_30], %57 {strides = array<i32>} : memref<1x1xf32, #tpu.memory_space<vmem>>, vector<1x1xf32>,
    } else {
    }
    %c0 = arith.constant 0 : index
    %c0_1 = arith.constant 0 : index
    %c0_2 = arith.constant 0 : index
    %c0_3 = arith.constant 0 : index
    %3 = vector.load %arg3[%c0, %c0_1, %c0_2, %c0_3] : memref<1x4x16x16xbf16, #tpu.memory_space<vmem>>, vector<1x4x16x16xbf16>
    %4 = vector.shape_cast %3 : vector<1x4x16x16xbf16> to vector<4x16x16xbf16>
    %5 = vector.shape_cast %4 : vector<4x16x16xbf16> to vector<64x16xbf16>
    %c0_4 = arith.constant 0 : index
    %c0_5 = arith.constant 0 : index
    %c0_6 = arith.constant 0 : index
    %c0_7 = arith.constant 0 : index
    %6 = vector.load %arg4[%c0_4, %c0_5, %c0_6, %c0_7] : memref<1x4x16x16xbf16, #tpu.memory_space<vmem>>, vector<1x4x16x16xbf16>
    %7 = vector.shape_cast %6 : vector<1x4x16x16xbf16> to vector<4x16x16xbf16>
    %8 = vector.shape_cast %7 : vector<4x16x16xbf16> to vector<64x16xbf16>
    %9 = arith.extf %5 : vector<64x16xbf16> to vector<64x16xf32>
    %cst = arith.constant 9.99999997E-7 : f32
    %cst_8 = arith.constant 0.999998986 : f32
    %10 = vector.broadcast %cst : f32 to vector<64x16xf32>
    %11 = arith.maximumf %10, %9 : vector<64x16xf32>
    %12 = vector.broadcast %cst_8 : f32 to vector<64x16xf32>
    %13 = arith.minimumf %12, %11 : vector<64x16xf32>
    %cst_9 = arith.constant 1.000000e+00 : bf16
    %14 = vector.broadcast %cst_9 : bf16 to vector<64x16xbf16>
    %15 = arith.cmpf oge, %8, %14 : vector<64x16xbf16>
    %cst_10 = arith.constant 1.000000e+00 : bf16
    %16 = vector.broadcast %cst_10 : bf16 to vector<64x16xbf16>
    %17 = arith.subf %16, %5 : vector<64x16xbf16>
    %18 = arith.mulf %17, %17 : vector<64x16xbf16>
    %19 = arith.extf %18 : vector<64x16xbf16> to vector<64x16xf32>
    %cst_11 = arith.constant 1.000000e+00 : bf16
    %20 = vector.broadcast %cst_11 : bf16 to vector<64x16xbf16>
    %21 = arith.subf %20, %8 : vector<64x16xbf16>
    %22 = arith.mulf %21, %21 : vector<64x16xbf16>
    %23 = arith.mulf %22, %22 : vector<64x16xbf16>
    %24 = arith.mulf %5, %5 : vector<64x16xbf16>
    %25 = arith.mulf %23, %24 : vector<64x16xbf16>
    %26 = arith.extf %25 : vector<64x16xbf16> to vector<64x16xf32>
    %27 = math.log %13 : vector<64x16xf32>
    %28 = arith.mulf %27, %19 : vector<64x16xf32>
    %cst_12 = arith.constant 1.000000e+00 : f32
    %29 = vector.broadcast %cst_12 : f32 to vector<64x16xf32>
    %30 = arith.subf %29, %13 : vector<64x16xf32>
    %31 = math.log %30 : vector<64x16xf32>
    %32 = arith.mulf %26, %31 : vector<64x16xf32>
    %33 = arith.select %15, %28, %32 : vector<64x16xi1>, vector<64x16xf32>
    %c0_13 = arith.constant 0 : index
    %c0_14 = arith.constant 0 : index
    %34 = vector.load %arg8[%c0_13, %c0_14] : memref<1x1xf32, #tpu.memory_space<vmem>>, vector<1x1xf32>
    %35 = vector.shape_cast %33 : vector<64x16xf32> to vector<1x64x16xf32>
    %cst_15 = arith.constant dense<0.000000e+00> : vector<1xf32>
    %36 = vector.multi_reduction <add>, %35, %cst_15 [1, 2] : vector<1x64x16xf32> to vector<1xf32>
    %37 = vector.shape_cast %36 : vector<1xf32> to vector<1x1x1xf32>
    %38 = vector.extract %37[0, 0, 0] : f32 from vector<1x1x1xf32>
    %39 = vector.broadcast %38 : f32 to vector<1x1xf32>
    %40 = arith.addf %34, %39 : vector<1x1xf32>
    %c0_16 = arith.constant 0 : index
    %c0_17 = arith.constant 0 : index
    %41 = vector.load %arg8[%c0_16, %c0_17] : memref<1x1xf32, #tpu.memory_space<vmem>>, vector<1x1xf32>
    tpu.vector_store %arg8[%c0_16, %c0_17], %40 {strides = array<i32>} : memref<1x1xf32, #tpu.memory_space<vmem>>, vector<1x1xf32>,
    %c0_18 = arith.constant 0 : index
    %c0_19 = arith.constant 0 : index
    %42 = vector.load %arg9[%c0_18, %c0_19] : memref<1x1xf32, #tpu.memory_space<vmem>>, vector<1x1xf32>
    %43 = arith.extui %15 : vector<64x16xi1> to vector<64x16xi32>
    %44 = arith.sitofp %43 : vector<64x16xi32> to vector<64x16xf32>
    %45 = vector.shape_cast %44 : vector<64x16xf32> to vector<1x64x16xf32>
    %cst_20 = arith.constant dense<0.000000e+00> : vector<1xf32>
    %46 = vector.multi_reduction <add>, %45, %cst_20 [1, 2] : vector<1x64x16xf32> to vector<1xf32>
    %47 = vector.shape_cast %46 : vector<1xf32> to vector<1x1x1xf32>
    %48 = vector.extract %47[0, 0, 0] : f32 from vector<1x1x1xf32>
    %49 = vector.broadcast %48 : f32 to vector<1x1xf32>
    %50 = arith.addf %42, %49 : vector<1x1xf32>
    %c0_21 = arith.constant 0 : index
    %c0_22 = arith.constant 0 : index
    %51 = vector.load %arg9[%c0_21, %c0_22] : memref<1x1xf32, #tpu.memory_space<vmem>>, vector<1x1xf32>
    tpu.vector_store %arg9[%c0_21, %c0_22], %50 {strides = array<i32>} : memref<1x1xf32, #tpu.memory_space<vmem>>, vector<1x1xf32>,
    %c0_i32_23 = arith.constant 0 : i32
    %52 = arith.cmpi eq, %arg1, %c0_i32_23 : i32
    %53 = arith.extui %52 : i1 to i32
    %c0_i32_24 = arith.constant 0 : i32
    %54 = arith.cmpi ne, %53, %c0_i32_24 : i32
    scf.if %54 {
      %55 = arith.index_cast %arg0 : i32 to index
      %56 = memref.load %arg2[%55] : memref<2xi32, #tpu.memory_space<smem>>
      %57 = arith.sitofp %56 : i32 to f32
      %c0_25 = arith.constant 0 : index
      %c0_26 = arith.constant 0 : index
      %58 = vector.load %arg9[%c0_25, %c0_26] : memref<1x1xf32, #tpu.memory_space<vmem>>, vector<1x1xf32>
      %c0_27 = arith.constant 0 : index
      %c0_28 = arith.constant 0 : index
      %59 = vector.load %arg8[%c0_27, %c0_28] : memref<1x1xf32, #tpu.memory_space<vmem>>, vector<1x1xf32>
      %cst_29 = arith.constant 0.000000e+00 : f32
      %60 = vector.broadcast %cst_29 : f32 to vector<1x1xf32>
      %61 = arith.subf %60, %59 : vector<1x1xf32>
      %cst_30 = arith.constant 0.000000e+00 : f32
      %62 = vector.broadcast %cst_30 : f32 to vector<1x1xf32>
      %63 = arith.cmpf ogt, %58, %62 : vector<1x1xf32>
      %cst_31 = arith.constant 1.000000e+00 : f32
      %64 = vector.broadcast %cst_31 : f32 to vector<1x1xf32>
      %65 = arith.select %63, %58, %64 : vector<1x1xi1>, vector<1x1xf32>
      %66 = arith.divf %61, %65 : vector<1x1xf32>
      %c0_32 = arith.constant 0 : index
      %c0_33 = arith.constant 0 : index
      %c0_34 = arith.constant 0 : index
      %67 = vector.load %arg6[%c0_32, %c0_33, %c0_34] : memref<1x8x6xf32, #tpu.memory_space<vmem>>, vector<1x8x6xf32>
      %68 = vector.shape_cast %67 : vector<1x8x6xf32> to vector<8x6xf32>
      %69 = vector.extract_strided_slice %68 {offsets = [0, 0], sizes = [8, 1], strides = [1, 1]} : vector<8x6xf32> to vector<8x1xf32>
      %70 = arith.fptosi %69 : vector<8x1xf32> to vector<8x1xi32>
      %71 = vector.extract_strided_slice %68 {offsets = [0, 1], sizes = [8, 1], strides = [1, 1]} : vector<8x6xf32> to vector<8x1xf32>
      %72 = arith.fptosi %71 : vector<8x1xf32> to vector<8x1xi32>
      %73 = vector.extract_strided_slice %68 {offsets = [0, 2], sizes = [8, 4], strides = [1, 1]} : vector<8x6xf32> to vector<8x4xf32>
      %74 = tpu.iota {dimensions = array<i32: 1>} : vector<8x16xi32>
      %75 = vector.broadcast %70 : vector<8x1xi32> to vector<8x16xi32>
      %76 = arith.cmpi eq, %74, %75 : vector<8x16xi32>
      %77 = arith.extui %76 : vector<8x16xi1> to vector<8x16xi32>
      %78 = arith.sitofp %77 : vector<8x16xi32> to vector<8x16xf32>
      %c0_35 = arith.constant 0 : index
      %c0_36 = arith.constant 0 : index
      %c0_37 = arith.constant 0 : index
      %79 = vector.load %arg5[%c0_35, %c0_36, %c0_37] : memref<1x16x64xf32, #tpu.memory_space<vmem>>, vector<1x16x64xf32>
      %80 = vector.shape_cast %79 : vector<1x16x64xf32> to vector<16x64xf32>
      %cst_38 = arith.constant dense<0.000000e+00> : vector<8x64xf32>
      %81 = tpu.matmul %78, %80, %cst_38 {dimension_numbers = #tpu.dot_dimension_numbers<[1], [0], [0], [1], [0, 0, 1, 1], [], []>} : vector<8x16xf32>, vector<16x64xf32>, vector<8x64xf32> -> vector<8x64xf32>
      %82 = tpu.iota {dimensions = array<i32: 1>} : vector<8x16xi32>
      %83 = vector.broadcast %72 : vector<8x1xi32> to vector<8x16xi32>
      %84 = arith.cmpi eq, %82, %83 : vector<8x16xi32>
      %85 = arith.extui %84 : vector<8x16xi1> to vector<8x16xi32>
      %86 = arith.sitofp %85 : vector<8x16xi32> to vector<8x16xf32>
      %87 = tpu.concatenate %86, %86, %86, %86 in 1 : vector<8x16xf32>, vector<8x16xf32>, vector<8x16xf32>, vector<8x16xf32> -> vector<8x64xf32>
      %88 = arith.mulf %81, %87 : vector<8x64xf32>
      %89 = tpu.iota {dimensions = array<i32: 0>} : vector<64x4xi32>
      %90 = tpu.iota {dimensions = array<i32: 1>} : vector<64x4xi32>
      %c16_i32 = arith.constant 16 : i32
      %91 = vector.broadcast %c16_i32 : i32 to vector<64x4xi32>
      %92 = arith.muli %90, %91 : vector<64x4xi32>
      %93 = arith.cmpi sge, %89, %92 : vector<64x4xi32>
      %c1_i32 = arith.constant 1 : i32
      %94 = vector.broadcast %c1_i32 : i32 to vector<64x4xi32>
      %95 = arith.addi %90, %94 : vector<64x4xi32>
      %c16_i32_39 = arith.constant 16 : i32
      %96 = vector.broadcast %c16_i32_39 : i32 to vector<64x4xi32>
      %97 = arith.muli %95, %96 : vector<64x4xi32>
      %98 = arith.cmpi slt, %89, %97 : vector<64x4xi32>
      %99 = arith.andi %93, %98 : vector<64x4xi1>
      %100 = arith.extui %99 : vector<64x4xi1> to vector<64x4xi32>
      %101 = arith.sitofp %100 : vector<64x4xi32> to vector<64x4xf32>
      %cst_40 = arith.constant dense<0.000000e+00> : vector<8x4xf32>
      %102 = tpu.matmul %88, %101, %cst_40 {dimension_numbers = #tpu.dot_dimension_numbers<[1], [0], [0], [1], [0, 0, 1, 1], [], []>} : vector<8x64xf32>, vector<64x4xf32>, vector<8x4xf32> -> vector<8x4xf32>
      %103 = tpu.iota {dimensions = array<i32: 0>} : vector<8x4xi32>
      %104 = vector.broadcast %56 : i32 to vector<8x4xi32>
      %105 = arith.cmpi slt, %103, %104 : vector<8x4xi32>
      %106 = arith.extui %105 : vector<8x4xi1> to vector<8x4xi32>
      %107 = arith.sitofp %106 : vector<8x4xi32> to vector<8x4xf32>
      %108 = arith.subf %102, %73 : vector<8x4xf32>
      %109 = math.absf %108 : vector<8x4xf32>
      %110 = arith.mulf %109, %107 : vector<8x4xf32>
      %111 = vector.shape_cast %110 : vector<8x4xf32> to vector<1x8x4xf32>
      %cst_41 = arith.constant dense<0.000000e+00> : vector<1xf32>
      %112 = vector.multi_reduction <add>, %111, %cst_41 [1, 2] : vector<1x8x4xf32> to vector<1xf32>
      %113 = vector.shape_cast %112 : vector<1xf32> to vector<1x1x1xf32>
      %114 = vector.extract %113[0, 0, 0] : f32 from vector<1x1x1xf32>
      %115 = vector.broadcast %114 : f32 to vector<1x1xf32>
      %cst_42 = arith.constant 2.000000e+00 : f32
      %116 = arith.mulf %cst_42, %57 : f32
      %cst_43 = arith.constant 1.000000e+00 : f32
      %117 = arith.maximumf %116, %cst_43 : f32
      %118 = vector.broadcast %117 : f32 to vector<1x1xf32>
      %119 = arith.divf %115, %118 : vector<1x1xf32>
      %120 = arith.addf %66, %119 : vector<1x1xf32>
      %c0_i32_44 = arith.constant 0 : i32
      %121 = arith.cmpi sgt, %56, %c0_i32_44 : i32
      %cst_45 = arith.constant 0.000000e+00 : f32
      %122 = vector.broadcast %cst_45 : f32 to vector<1x1xf32>
      %123 = arith.select %121, %120, %122 : vector<1x1xf32>
      %c0_46 = arith.constant 0 : index
      %c0_47 = arith.constant 0 : index
      %c0_48 = arith.constant 0 : index
      %124 = vector.load %arg7[%c0_46, %c0_47, %c0_48] : memref<1x1x1xf32, #tpu.memory_space<vmem>>, vector<1x1x1xf32>
      %125 = vector.shape_cast %124 : vector<1x1x1xf32> to vector<1x1xf32>
      %126 = vector.shape_cast %123 : vector<1x1xf32> to vector<1x1x1xf32>
      tpu.vector_store %arg7[%c0_46, %c0_47, %c0_48], %126 {strides = array<i32>} : memref<1x1x1xf32, #tpu.memory_space<vmem>>, vector<1x1x1xf32>,
    } else {
    }
    return
  }
  func.func @transform_0(%arg0: i32, %arg1: i32, %arg2: memref<2xi32, #tpu.memory_space<smem>>) -> (i32, i32, i32, i32) {
    %c0_i32 = arith.constant 0 : i32
    %c0_i32_0 = arith.constant 0 : i32
    %c0_i32_1 = arith.constant 0 : i32
    return %arg0, %arg1, %c0_i32, %c0_i32_0 : i32, i32, i32, i32
  }
  func.func @transform_1(%arg0: i32, %arg1: i32, %arg2: memref<2xi32, #tpu.memory_space<smem>>) -> (i32, i32, i32, i32) {
    %c0_i32 = arith.constant 0 : i32
    %c0_i32_0 = arith.constant 0 : i32
    %c0_i32_1 = arith.constant 0 : i32
    return %arg0, %arg1, %c0_i32, %c0_i32_0 : i32, i32, i32, i32
  }
  func.func @transform_2(%arg0: i32, %arg1: i32, %arg2: memref<2xi32, #tpu.memory_space<smem>>) -> (i32, i32, i32) {
    %c0_i32 = arith.constant 0 : i32
    %c0_i32_0 = arith.constant 0 : i32
    %c0_i32_1 = arith.constant 0 : i32
    return %arg0, %c0_i32, %c0_i32_0 : i32, i32, i32
  }
  func.func @transform_3(%arg0: i32, %arg1: i32, %arg2: memref<2xi32, #tpu.memory_space<smem>>) -> (i32, i32, i32) {
    %c0_i32 = arith.constant 0 : i32
    %c0_i32_0 = arith.constant 0 : i32
    %c0_i32_1 = arith.constant 0 : i32
    return %arg0, %c0_i32, %c0_i32_0 : i32, i32, i32
  }
  func.func @transform_4(%arg0: i32, %arg1: i32, %arg2: memref<2xi32, #tpu.memory_space<smem>>) -> (i32, i32, i32) {
    %c0_i32 = arith.constant 0 : i32
    %c0_i32_0 = arith.constant 0 : i32
    %c0_i32_1 = arith.constant 0 : i32
    return %arg0, %c0_i32, %c0_i32_0 : i32, i32, i32
  }
}

</mosaic_0001>

<llo_original>
// kernel: tpu_custom_call.1
$region0: #{tpu_custom_call.1}
  #allocation0 [shape = 'u32[]', space=smem, size = 0x4, offset = 0x4, fixed_abs, tag = 'smem constant byte address 0x4 - core index']
  #allocation1 [shape = 'u32[72,128]{1,0:T(1,128)}', space=vmem, size = 0x9000, scoped, tag = 'internal scratch']
  #allocation2 [shape = 'f32[1,1]{1,0:T(1,128)}', space=vmem, size = 0x200, scoped, tag = 'scratch operand']
  #allocation3 [shape = 'f32[1,1]{1,0:T(1,128)}', space=vmem, size = 0x200, scoped, tag = 'scratch operand']
  #allocation4 [shape = 's32[1]{0}', space=sflag, size = 0x4, scoped, tag = 'scoped memory for tpu_custom_call.1']
  #allocation5 [shape = 'u8[512]{0}', space=smem, size = 0x200, scoped, tag = 'prefetched SMEM operand 0']
  %s0 = inlined_call_operand.vmem [shape: s32[2], index: 0, kind: input, shape index: {}]
  %s1 = inlined_call_operand.hbm [shape: bf16[2,4,16,16], index: 1, kind: input, shape index: {}]
  %s2 = inlined_call_operand.hbm [shape: bf16[2,4,16,16], index: 2, kind: input, shape index: {}]
  %s3 = inlined_call_operand.hbm [shape: f32[2,16,64], index: 3, kind: input, shape index: {}]
  %s4 = inlined_call_operand.vmem [shape: f32[2,8,6], index: 4, kind: input, shape index: {}]
  %s5 = inlined_call_operand.vmem [shape: f32[2,1,1], index: 5, kind: output, shape index: {}]
  %s6 = sld [smem:[#allocation0]]
  $region69: #{tpu_custom_call.1} parent=0
    _
  %s8 = ssub.s32 1, %s6
  %s9 = scalar_select 0, %s8, %s6
  %s11 = sshll.u32 %s0, 4
  %s12 = int_to_ptr.vmem [resolvable:$true] %s11
  %14 = dma.vmem_to_smem %s12, 16, [#allocation5], [#allocation4]
  %16 = dma.done [#allocation4], 16
  %17 = sfence
  $region1: #{tpu_custom_call.1} parent=0
    #allocation6 [shape = 'u8[32768]{0}', space=vmem, size = 0x8000, scoped, tag = 'input window, operand 1']
    #allocation7 [shape = 's32[2]{0}', space=sflag, size = 0x8, scoped, tag = 'scoped memory for tpu_custom_call.1']
    #allocation8 [shape = 'u8[32768]{0}', space=vmem, size = 0x8000, scoped, tag = 'input window, operand 2']
    #allocation9 [shape = 's32[2]{0}', space=sflag, size = 0x8, scoped, tag = 'scoped memory for tpu_custom_call.1']
    #allocation10 [shape = 'u8[16384]{0}', space=vmem, size = 0x4000, scoped, tag = 'input window, operand 3']
    %18 = vsyncpa [#allocation7], 0
    %s19 = scalar_lea.sflag [#allocation7], 1
    %20 = vsyncpa %s19, 0
    %21 = vsyncpa [#allocation9], 0
    %s22 = scalar_lea.sflag [#allocation9], 1
    %23 = vsyncpa %s22, 0
    loop: start=0, step=1, limit=4
    $region2: #{tpu_custom_call.1} parent=1 // loop_pre_header
      _
    $region3: #{tpu_custom_call.1} parent=1 // loop_header
      %s25 = sphi 0, %s29
      %p26 = scmp.ge.s32.totalorder %s25, 4
      %s32 = sphi 0, %s44
      %s33 = sphi 0, %s40
      %s34 = sphi 0, %s32
      %s35 = sphi 0, %s33
      %s36 = sphi 0, %s34
      %s37 = sphi 0, %s35
      %s49 = sphi 0, %s51
      %s52 = sphi 0, %s49
      %s53 = sphi 0, %s52
      %s69 = sphi 0, %s53
      %s77 = sphi 0, %s79
      %s80 = sphi 0, %s77
      %s81 = sphi 0, %s80
      %s97 = sphi 0, %s81
      %s103 = sphi 0, %s105
      %s106 = sphi 0, %s103
      %s107 = sphi 0, %s106
      %s123 = sphi 0, %s107
      %s129 = sphi 0, %s131
      %s132 = sphi 0, %s129
      %s133 = sphi 0, %s132
      %s149 = sphi 0, %s133
      %s155 = sphi 0, %s157
      %s158 = sphi 0, %s155
      %s159 = sphi 0, %s158
      %s175 = sphi 0, %s159
    $region4: #{tpu_custom_call.1} parent=1 // loop_header_branch
      %28 = sbr.rel (%p26) target = $region8
    $region5: #{tpu_custom_call.1} parent=1 // loop_body
      %s30 = ssub.s32 %s25, 1
      %s31 = ssub.s32 %s25, 2
      %s38 = sadd.s32 1, %s33
      %p39 = scmp.ge.s32.totalorder %s38, 1
      %s40 = scalar_select %p39, 0, %s38
      %s41 = sadd.s32 1, %s32
      %s42 = scalar_select %p39, %s41, %s32
      %p43 = scmp.ge.s32.totalorder %s42, 2
      %s44 = scalar_select %p43, 0, %s42
      %s45 = ssub.s32 %s32, %s44
      %s46 = ssub.s32 %s33, %s40
      %s47 = sor.u32 %s45, %s46
      %p48 = scmp.eq.s32.totalorder %s47, 0
      %s50 = sadd.s32 %s49, 1
      %s51 = scalar_select %p48, %s49, %s50
      %p54 = pneg %p48
      %p55 = scmp.eq.s32.totalorder %s25, 1
      %p56 = por %p54, %p55
      %p57 = scmp.ne.s32.totalorder %s49, %s52
      %p58 = scmp.eq.s32.totalorder %s25, 0
      %p59 = por %p57, %p58
      %p60 = scmp.ne.s32.totalorder %s49, %s52
      %p61 = scmp.eq.s32.totalorder %s30, 1
      %p62 = por %p60, %p61
      %p63 = scmp.ne.s32.totalorder %s52, %s53
      %p64 = scmp.eq.s32.totalorder %s30, 0
      %p65 = por %p63, %p64
      %p66 = scmp.ne.s32.totalorder %s52, %s53
      %p67 = scmp.eq.s32.totalorder %s31, 1
      %p68 = por %p66, %p67
      %p70 = scmp.ne.s32.totalorder %s53, %s69
      %p71 = scmp.eq.s32.totalorder %s31, 0
      %p72 = por %p70, %p71
      %s73 = ssub.s32 %s32, %s44
      %s74 = ssub.s32 %s33, %s40
      %s75 = sor.u32 %s73, %s74
      %p76 = scmp.eq.s32.totalorder %s75, 0
      %s78 = sadd.s32 %s77, 1
      %s79 = scalar_select %p76, %s77, %s78
      %p82 = pneg %p76
      %p83 = scmp.eq.s32.totalorder %s25, 1
      %p84 = por %p82, %p83
      %p85 = scmp.ne.s32.totalorder %s77, %s80
      %p86 = scmp.eq.s32.totalorder %s25, 0
      %p87 = por %p85, %p86
      %p88 = scmp.ne.s32.totalorder %s77, %s80
      %p89 = scmp.eq.s32.totalorder %s30, 1
      %p90 = por %p88, %p89
      %p91 = scmp.ne.s32.totalorder %s80, %s81
      %p92 = scmp.eq.s32.totalorder %s30, 0
      %p93 = por %p91, %p92
      %p94 = scmp.ne.s32.totalorder %s80, %s81
      %p95 = scmp.eq.s32.totalorder %s31, 1
      %p96 = por %p94, %p95
      %p98 = scmp.ne.s32.totalorder %s81, %s97
      %p99 = scmp.eq.s32.totalorder %s31, 0
      %p100 = por %p98, %p99
      %s101 = ssub.s32 %s32, %s44
      %p102 = scmp.eq.s32.totalorder %s101, 0
      %s104 = sadd.s32 %s103, 1
      %s105 = scalar_select %p102, %s103, %s104
      %p108 = pneg %p102
      %p109 = scmp.eq.s32.totalorder %s25, 1
      %p110 = por %p108, %p109
      %p111 = scmp.ne.s32.totalorder %s103, %s106
      %p112 = scmp.eq.s32.totalorder %s25, 0
      %p113 = por %p111, %p112
      %p114 = scmp.ne.s32.totalorder %s103, %s106
      %p115 = scmp.eq.s32.totalorder %s30, 1
      %p116 = por %p114, %p115
      %p117 = scmp.ne.s32.totalorder %s106, %s107
      %p118 = scmp.eq.s32.totalorder %s30, 0
      %p119 = por %p117, %p118
      %p120 = scmp.ne.s32.totalorder %s106, %s107
      %p121 = scmp.eq.s32.totalorder %s31, 1
      %p122 = por %p120, %p121
      %p124 = scmp.ne.s32.totalorder %s107, %s123
      %p125 = scmp.eq.s32.totalorder %s31, 0
      %p126 = por %p124, %p125
      %s127 = ssub.s32 %s32, %s44
      %p128 = scmp.eq.s32.totalorder %s127, 0
      %s130 = sadd.s32 %s129, 1
      %s131 = scalar_select %p128, %s129, %s130
      %p134 = pneg %p128
      %p135 = scmp.eq.s32.totalorder %s25, 1
      %p136 = por %p134, %p135
      %p137 = scmp.ne.s32.totalorder %s129, %s132
      %p138 = scmp.eq.s32.totalorder %s25, 0
      %p139 = por %p137, %p138
      %p140 = scmp.ne.s32.totalorder %s129, %s132
      %p141 = scmp.eq.s32.totalorder %s30, 1
      %p142 = por %p140, %p141
      %p143 = scmp.ne.s32.totalorder %s132, %s133
      %p144 = scmp.eq.s32.totalorder %s30, 0
      %p145 = por %p143, %p144
      %p146 = scmp.ne.s32.totalorder %s132, %s133
      %p147 = scmp.eq.s32.totalorder %s31, 1
      %p148 = por %p146, %p147
      %p150 = scmp.ne.s32.totalorder %s133, %s149
      %p151 = scmp.eq.s32.totalorder %s31, 0
      %p152 = por %p150, %p151
      %s153 = ssub.s32 %s32, %s44
      %p154 = scmp.eq.s32.totalorder %s153, 0
      %s156 = sadd.s32 %s155, 1
      %s157 = scalar_select %p154, %s155, %s156
      %p160 = pneg %p154
      %p161 = scmp.eq.s32.totalorder %s25, 1
      %p162 = por %p160, %p161
      %p163 = scmp.ne.s32.totalorder %s155, %s158
      %p164 = scmp.eq.s32.totalorder %s25, 0
      %p165 = por %p163, %p164
      %p166 = scmp.ne.s32.totalorder %s155, %s158
      %p167 = scmp.eq.s32.totalorder %s30, 1
      %p168 = por %p166, %p167
      %p169 = scmp.ne.s32.totalorder %s158, %s159
      %p170 = scmp.eq.s32.totalorder %s30, 0
      %p171 = por %p169, %p170
      %p172 = scmp.ne.s32.totalorder %s158, %s159
      %p173 = scmp.eq.s32.totalorder %s31, 1
      %p174 = por %p172, %p173
      %p176 = scmp.ne.s32.totalorder %s159, %s175
      %p177 = scmp.eq.s32.totalorder %s31, 0
      %p178 = por %p176, %p177
      %p179 = scmp.le.s32.totalorder 1, %s25
      %p180 = scmp.lt.s32.totalorder %s25, 3
      %p181 = pnand %p179, %p180
      %p182 = pneg %p181
      // Predicated region
      $region9: #{tpu_custom_call.1} parent=5 // pred_check
        _
      $region10: #{tpu_custom_call.1} parent=5 // pred_check_branch
        %184 = sbr.rel (%p181) target = $region12
      $region11: #{tpu_custom_call.1} parent=5 // pred_region
        %s185 = ssub.s32 %s25, 1
      $region12: #{tpu_custom_call.1} parent=5 // pred_fallthru
        _
      %p186 = scmp.lt.s32.totalorder %s25, 2
      // Predicated region
      $region13: #{tpu_custom_call.1} parent=5 // pred_check
        %p187 = pneg %p186
      $region14: #{tpu_custom_call.1} parent=5 // pred_check_branch
        %189 = sbr.rel (%p187) target = $region16
      $region15: #{tpu_custom_call.1} parent=5 // pred_region
        // Predicated region
        $region17: #{tpu_custom_call.1} parent=15 // pred_check
          %p190 = pneg %p59
        $region18: #{tpu_custom_call.1} parent=15 // pred_check_branch
          %192 = sbr.rel (%p190) target = $region20
        $region19: #{tpu_custom_call.1} parent=15 // pred_region
          %s193 = sand.u32 %s49, 1
          %s194 = scalar_lea.sflag [#allocation7], %s193
          %s195 = sand.u32 %s49, 1
          %s196 = smul.addr %s195, 32
          %s197 = scalar_lea.vmem [#allocation6], %s196
          %s198 = smul.u32 4, %s33
          %200 = vsyncadd %s194, 0
          %s201 = smul.addr %s198, 2
          %s202 = smul.addr %s32, 8
          %s203 = sadd.s32 %s201, %s202
          %s204 = smul.addr %s203, 4
          %s205 = scalar_lea.hbm %s1, %s204
          %s206 = sshll.u32 %s205, 4
          %s207 = int_to_ptr.hbm [resolvable:$true] %s206
          %s208 = sshll.u32 %s197, 4
          %s209 = int_to_ptr.vmem [resolvable:$true] %s208
          %214 = dma.hbm_to_vmem [thread:$0]  %s207, 512, %s209, %s194, 64, 64, 4
        $region20: #{tpu_custom_call.1} parent=15 // pred_fallthru
          _
        // Predicated region
        $region21: #{tpu_custom_call.1} parent=15 // pred_check
          %p215 = pneg %p87
        $region22: #{tpu_custom_call.1} parent=15 // pred_check_branch
          %217 = sbr.rel (%p215) target = $region24
        $region23: #{tpu_custom_call.1} parent=15 // pred_region
          %s218 = sand.u32 %s25, 1
          %s219 = scalar_lea.sflag [#allocation9], %s218
          %s220 = sand.u32 %s77, 1
          %s221 = smul.addr %s220, 32
          %s222 = scalar_lea.vmem [#allocation8], %s221
          %s223 = smul.u32 4, %s33
          %225 = vsyncadd %s219, 0
          %s226 = smul.addr %s223, 2
          %s227 = smul.addr %s32, 8
          %s228 = sadd.s32 %s226, %s227
          %s229 = smul.addr %s228, 4
          %s230 = scalar_lea.hbm %s2, %s229
          %s231 = sshll.u32 %s230, 4
          %s232 = int_to_ptr.hbm [resolvable:$true] %s231
          %s233 = sshll.u32 %s222, 4
          %s234 = int_to_ptr.vmem [resolvable:$true] %s233
          %239 = dma.hbm_to_vmem [thread:$0]  %s232, 512, %s234, %s219, 64, 64, 4
        $region24: #{tpu_custom_call.1} parent=15 // pred_fallthru
          _
        // Predicated region
        $region25: #{tpu_custom_call.1} parent=15 // pred_check
          %p240 = pneg %p113
        $region26: #{tpu_custom_call.1} parent=15 // pred_check_branch
          %242 = sbr.rel (%p240) target = $region28
        $region27: #{tpu_custom_call.1} parent=15 // pred_region
          %s243 = sand.u32 %s25, 1
          %s244 = scalar_lea.sflag [#allocation9], %s243
          %s245 = sand.u32 %s103, 1
          %s246 = smul.addr %s245, 16
          %s247 = scalar_lea.vmem [#allocation10], %s246
          %249 = vsyncadd %s244, 0
          %s250 = smul.addr %s32, 2
          %s251 = smul.addr %s250, 8
          %s252 = scalar_lea.hbm %s3, %s251
          %s253 = sshll.u32 %s252, 4
          %s254 = int_to_ptr.hbm [resolvable:$true] %s253
          %s255 = sshll.u32 %s247, 4
          %s256 = int_to_ptr.vmem [resolvable:$true] %s255
          %261 = dma.hbm_to_vmem [thread:$0]  %s254, 256, %s256, %s244, 128, 128, 8
        $region28: #{tpu_custom_call.1} parent=15 // pred_fallthru
          _
        // Predicated region
        $region29: #{tpu_custom_call.1} parent=15 // pred_check
          %p262 = pneg %p139
        $region30: #{tpu_custom_call.1} parent=15 // pred_check_branch
          %264 = sbr.rel (%p262) target = $region32
        $region31: #{tpu_custom_call.1} parent=15 // pred_region
          %p265 = scmp.lt.s32.totalorder %s32, 1
          %s266 = scalar_select %p265, %s32, 1
          %s267 = smul.addr %s266, 8
          %s268 = scalar_lea.vmem %s4, %s267
        $region32: #{tpu_custom_call.1} parent=15 // pred_fallthru
          _
      $region16: #{tpu_custom_call.1} parent=5 // pred_fallthru
        _
      %p269 = scmp.le.s32.totalorder 1, %s25
      %p270 = scmp.lt.s32.totalorder %s25, 3
      %p271 = pnand %p269, %p270
      %p272 = pneg %p271
      // Predicated region
      $region33: #{tpu_custom_call.1} parent=5 // pred_check
        _
      $region34: #{tpu_custom_call.1} parent=5 // pred_check_branch
        %274 = sbr.rel (%p271) target = $region36
      $region35: #{tpu_custom_call.1} parent=5 // pred_region
        %s275 = ssub.s32 %s25, 1
        %s276 = sand.u32 %s52, 1
        %s277 = scalar_lea.sflag [#allocation7], %s276
        %s278 = sand.u32 %s52, 1
        %s279 = smul.addr %s278, 32
        %s280 = scalar_lea.vmem [#allocation6], %s279
        // Predicated region
        $region37: #{tpu_custom_call.1} parent=35 // pred_check
          %p281 = pneg %p65
        $region38: #{tpu_custom_call.1} parent=35 // pred_check_branch
          %283 = sbr.rel (%p281) target = $region40
        $region39: #{tpu_custom_call.1} parent=35 // pred_region
          %285 = dma.done %s277, 512
        $region40: #{tpu_custom_call.1} parent=35 // pred_fallthru
          _
        %s286 = sand.u32 %s30, 1
        %s287 = scalar_lea.sflag [#allocation9], %s286
        %s288 = sand.u32 %s80, 1
        %s289 = smul.addr %s288, 32
        %s290 = scalar_lea.vmem [#allocation8], %s289
        // Predicated region
        $region41: #{tpu_custom_call.1} parent=35 // pred_check
          %p291 = pneg %p93
        $region42: #{tpu_custom_call.1} parent=35 // pred_check_branch
          %293 = sbr.rel (%p291) target = $region44
        $region43: #{tpu_custom_call.1} parent=35 // pred_region
          %295 = dma.done %s287, 512
        $region44: #{tpu_custom_call.1} parent=35 // pred_fallthru
          _
        %s296 = sand.u32 %s30, 1
        %s297 = scalar_lea.sflag [#allocation9], %s296
        %s298 = sand.u32 %s106, 1
        %s299 = smul.addr %s298, 16
        %s300 = scalar_lea.vmem [#allocation10], %s299
        // Predicated region
        $region45: #{tpu_custom_call.1} parent=35 // pred_check
          %p301 = pneg %p119
        $region46: #{tpu_custom_call.1} parent=35 // pred_check_branch
          %303 = sbr.rel (%p301) target = $region48
        $region47: #{tpu_custom_call.1} parent=35 // pred_region
          %305 = dma.done %s297, 256
        $region48: #{tpu_custom_call.1} parent=35 // pred_fallthru
          _
        %s306 = sand.u32 %s52, 1
        %s307 = scalar_lea.sflag [#allocation7], %s306
        %s308 = sand.u32 %s52, 1
        %s309 = smul.addr %s308, 32
        %s310 = scalar_lea.vmem [#allocation6], %s309
        %p311 = pneg %p65
        %p312 = pneg %p62
        %s313 = sand.u32 %s30, 1
        %s314 = scalar_lea.sflag [#allocation9], %s313
        %s315 = sand.u32 %s80, 1
        %s316 = smul.addr %s315, 32
        %s317 = scalar_lea.vmem [#allocation8], %s316
        %p318 = pneg %p93
        %p319 = pneg %p90
        %s320 = sand.u32 %s30, 1
        %s321 = scalar_lea.sflag [#allocation9], %s320
        %s322 = sand.u32 %s106, 1
        %s323 = smul.addr %s322, 16
        %s324 = scalar_lea.vmem [#allocation10], %s323
        %p325 = pneg %p119
        %p326 = pneg %p116
        %p327 = scmp.lt.s32.totalorder %s34, 1
        %s328 = scalar_select %p327, %s34, 1
        %s329 = smul.addr %s328, 8
        %s330 = scalar_lea.vmem %s4, %s329
        %p331 = pneg %p145
        %p332 = pneg %p142
        %p333 = pneg %p171
        %p334 = pneg %p168
        %p335 = scmp.lt.s32.totalorder %s34, 1
        %s336 = scalar_select %p335, %s34, 1
        %s337 = scalar_lea.vmem %s5, %s336
        %s338 = smul.u32 4, %s35
        %s339 = smul.u32 4, %s35
        %p340 = scmp.lt.s32.totalorder %s34, 1
        %s341 = scalar_select %p340, %s34, 1
        %s342 = smul.addr %s341, 8
        %s343 = scalar_lea.vmem %s4, %s342
        %p344 = scmp.lt.s32.totalorder %s34, 1
        %s345 = scalar_select %p344, %s34, 1
        %s346 = scalar_lea.vmem %s5, %s345
        %p347 = scmp.eq.s32.totalorder %s35, 0
        // Predicated region
        $region49: #{tpu_custom_call.1} parent=35 // pred_check
          %p348 = pneg %p347
        $region50: #{tpu_custom_call.1} parent=35 // pred_check_branch
          %350 = sbr.rel (%p348) target = $region52
        $region51: #{tpu_custom_call.1} parent=35 // pred_region
          %vm351 = vcmask 0
          %352 = vst.msk [vmem:[#allocation2] sm:$0x1] %vm351, 0.0
          %353 = vst.msk [vmem:[#allocation3] sm:$0x1] %vm351, 0.0
        $region52: #{tpu_custom_call.1} parent=35 // pred_fallthru
          _
        %v354 = vld [vmem:[%s280] sm:$0xf]
        %v355 = vld [vmem:[%s280 + $0x4] sm:$0xf]
        %v356 = vld [vmem:[%s280 + $0x8] sm:$0xf]
        %v357 = vld [vmem:[%s280 + $0xc] sm:$0xf]
        %v358 = vld [vmem:[%s280 + $0x10] sm:$0xf]
        %v359 = vld [vmem:[%s280 + $0x14] sm:$0xf]
        %v360 = vld [vmem:[%s280 + $0x18] sm:$0xf]
        %v361 = vld [vmem:[%s280 + $0x1c] sm:$0xf]
        %v362 = vld [vmem:[%s290] sm:$0xf]
        %v363 = vld [vmem:[%s290 + $0x4] sm:$0xf]
        %v364 = vld [vmem:[%s290 + $0x8] sm:$0xf]
        %v365 = vld [vmem:[%s290 + $0xc] sm:$0xf]
        %v366 = vld [vmem:[%s290 + $0x10] sm:$0xf]
        %v367 = vld [vmem:[%s290 + $0x14] sm:$0xf]
        %v368 = vld [vmem:[%s290 + $0x18] sm:$0xf]
        %v369 = vld [vmem:[%s290 + $0x1c] sm:$0xf]
        %v370 = vunpack.c.l.bf16 %v354
        %v371 = vunpack.c.l.bf16 %v355
        %v372 = vunpack.c.l.bf16 %v356
        %v373 = vunpack.c.l.bf16 %v357
        %v374 = vunpack.c.l.bf16 %v358
        %v375 = vunpack.c.l.bf16 %v359
        %v376 = vunpack.c.l.bf16 %v360
        %v377 = vunpack.c.l.bf16 %v361
        %v378 = vmax.f32 %v370, 1e-06
        %v379 = vmax.f32 %v371, 1e-06
        %v380 = vmax.f32 %v372, 1e-06
        %v381 = vmax.f32 %v373, 1e-06
        %v382 = vmax.f32 %v374, 1e-06
        %v383 = vmax.f32 %v375, 1e-06
        %v384 = vmax.f32 %v376, 1e-06
        %v385 = vmax.f32 %v377, 1e-06
        %v386 = vmin.f32 %v378, 0.999999
        %v387 = vmin.f32 %v379, 0.999999
        %v388 = vmin.f32 %v380, 0.999999
        %v389 = vmin.f32 %v381, 0.999999
        %v390 = vmin.f32 %v382, 0.999999
        %v391 = vmin.f32 %v383, 0.999999
        %v392 = vmin.f32 %v384, 0.999999
        %v393 = vmin.f32 %v385, 0.999999
        %v394 = vunpack.c.l.bf16 %v362
        %v395 = vunpack.c.l.bf16 %v363
        %v396 = vunpack.c.l.bf16 %v364
        %v397 = vunpack.c.l.bf16 %v365
        %v398 = vunpack.c.l.bf16 %v366
        %v399 = vunpack.c.l.bf16 %v367
        %v400 = vunpack.c.l.bf16 %v368
        %v401 = vunpack.c.l.bf16 %v369
        %vm402 = vcmp.ge.f32.partialorder %v394, 1.0
        %vm403 = vcmp.ge.f32.partialorder %v395, 1.0
        %vm404 = vcmp.ge.f32.partialorder %v396, 1.0
        %vm405 = vcmp.ge.f32.partialorder %v397, 1.0
        %vm406 = vcmp.ge.f32.partialorder %v398, 1.0
        %vm407 = vcmp.ge.f32.partialorder %v399, 1.0
        %vm408 = vcmp.ge.f32.partialorder %v400, 1.0
        %vm409 = vcmp.ge.f32.partialorder %v401, 1.0
        %v410 = vsub.f32 1.0, %v370
        %v411 = vsub.f32 1.0, %v371
        %v412 = vsub.f32 1.0, %v372
        %v413 = vsub.f32 1.0, %v373
        %v414 = vsub.f32 1.0, %v374
        %v415 = vsub.f32 1.0, %v375
        %v416 = vsub.f32 1.0, %v376
        %v417 = vsub.f32 1.0, %v377
        %v418 = vpack.c.bf16 %v410, %v410
        %v419 = vpack.c.bf16 %v411, %v411
        %v420 = vpack.c.bf16 %v412, %v412
        %v421 = vpack.c.bf16 %v413, %v413
        %v422 = vpack.c.bf16 %v414, %v414
        %v423 = vpack.c.bf16 %v415, %v415
        %v424 = vpack.c.bf16 %v416, %v416
        %v425 = vpack.c.bf16 %v417, %v417
        %v426 = vunpack.c.l.bf16 %v418
        %v427 = vunpack.c.l.bf16 %v419
        %v428 = vunpack.c.l.bf16 %v420
        %v429 = vunpack.c.l.bf16 %v421
        %v430 = vunpack.c.l.bf16 %v422
        %v431 = vunpack.c.l.bf16 %v423
        %v432 = vunpack.c.l.bf16 %v424
        %v433 = vunpack.c.l.bf16 %v425
        %v434 = vmul.f32 %v426, %v426
        %v435 = vmul.f32 %v427, %v427
        %v436 = vmul.f32 %v428, %v428
        %v437 = vmul.f32 %v429, %v429
        %v438 = vmul.f32 %v430, %v430
        %v439 = vmul.f32 %v431, %v431
        %v440 = vmul.f32 %v432, %v432
        %v441 = vmul.f32 %v433, %v433
        %v442 = vpack.c.bf16 %v434, %v434
        %v443 = vpack.c.bf16 %v435, %v435
        %v444 = vpack.c.bf16 %v436, %v436
        %v445 = vpack.c.bf16 %v437, %v437
        %v446 = vpack.c.bf16 %v438, %v438
        %v447 = vpack.c.bf16 %v439, %v439
        %v448 = vpack.c.bf16 %v440, %v440
        %v449 = vpack.c.bf16 %v441, %v441
        %v450 = vunpack.c.l.bf16 %v442
        %v451 = vunpack.c.l.bf16 %v443
        %v452 = vunpack.c.l.bf16 %v444
        %v453 = vunpack.c.l.bf16 %v445
        %v454 = vunpack.c.l.bf16 %v446
        %v455 = vunpack.c.l.bf16 %v447
        %v456 = vunpack.c.l.bf16 %v448
        %v457 = vunpack.c.l.bf16 %v449
        %v458 = vsub.f32 1.0, %v394
        %v459 = vsub.f32 1.0, %v395
        %v460 = vsub.f32 1.0, %v396
        %v461 = vsub.f32 1.0, %v397
        %v462 = vsub.f32 1.0, %v398
        %v463 = vsub.f32 1.0, %v399
        %v464 = vsub.f32 1.0, %v400
        %v465 = vsub.f32 1.0, %v401
        %v466 = vpack.c.bf16 %v458, %v458
        %v467 = vpack.c.bf16 %v459, %v459
        %v468 = vpack.c.bf16 %v460, %v460
        %v469 = vpack.c.bf16 %v461, %v461
        %v470 = vpack.c.bf16 %v462, %v462
        %v471 = vpack.c.bf16 %v463, %v463
        %v472 = vpack.c.bf16 %v464, %v464
        %v473 = vpack.c.bf16 %v465, %v465
        %v474 = vunpack.c.l.bf16 %v466
        %v475 = vunpack.c.l.bf16 %v467
        %v476 = vunpack.c.l.bf16 %v468
        %v477 = vunpack.c.l.bf16 %v469
        %v478 = vunpack.c.l.bf16 %v470
        %v479 = vunpack.c.l.bf16 %v471
        %v480 = vunpack.c.l.bf16 %v472
        %v481 = vunpack.c.l.bf16 %v473
        %v482 = vmul.f32 %v474, %v474
        %v483 = vmul.f32 %v475, %v475
        %v484 = vmul.f32 %v476, %v476
        %v485 = vmul.f32 %v477, %v477
        %v486 = vmul.f32 %v478, %v478
        %v487 = vmul.f32 %v479, %v479
        %v488 = vmul.f32 %v480, %v480
        %v489 = vmul.f32 %v481, %v481
        %v490 = vpack.c.bf16 %v482, %v482
        %v491 = vpack.c.bf16 %v483, %v483
        %v492 = vpack.c.bf16 %v484, %v484
        %v493 = vpack.c.bf16 %v485, %v485
        %v494 = vpack.c.bf16 %v486, %v486
        %v495 = vpack.c.bf16 %v487, %v487
        %v496 = vpack.c.bf16 %v488, %v488
        %v497 = vpack.c.bf16 %v489, %v489
        %v498 = vunpack.c.l.bf16 %v490
        %v499 = vunpack.c.l.bf16 %v491
        %v500 = vunpack.c.l.bf16 %v492
        %v501 = vunpack.c.l.bf16 %v493
        %v502 = vunpack.c.l.bf16 %v494
        %v503 = vunpack.c.l.bf16 %v495
        %v504 = vunpack.c.l.bf16 %v496
        %v505 = vunpack.c.l.bf16 %v497
        %v506 = vmul.f32 %v498, %v498
        %v507 = vmul.f32 %v499, %v499
        %v508 = vmul.f32 %v500, %v500
        %v509 = vmul.f32 %v501, %v501
        %v510 = vmul.f32 %v502, %v502
        %v511 = vmul.f32 %v503, %v503
        %v512 = vmul.f32 %v504, %v504
        %v513 = vmul.f32 %v505, %v505
        %v514 = vpack.c.bf16 %v506, %v506
        %v515 = vpack.c.bf16 %v507, %v507
        %v516 = vpack.c.bf16 %v508, %v508
        %v517 = vpack.c.bf16 %v509, %v509
        %v518 = vpack.c.bf16 %v510, %v510
        %v519 = vpack.c.bf16 %v511, %v511
        %v520 = vpack.c.bf16 %v512, %v512
        %v521 = vpack.c.bf16 %v513, %v513
        %v522 = vmul.f32 %v370, %v370
        %v523 = vmul.f32 %v371, %v371
        %v524 = vmul.f32 %v372, %v372
        %v525 = vmul.f32 %v373, %v373
        %v526 = vmul.f32 %v374, %v374
        %v527 = vmul.f32 %v375, %v375
        %v528 = vmul.f32 %v376, %v376
        %v529 = vmul.f32 %v377, %v377
        %v530 = vpack.c.bf16 %v522, %v522
        %v531 = vpack.c.bf16 %v523, %v523
        %v532 = vpack.c.bf16 %v524, %v524
        %v533 = vpack.c.bf16 %v525, %v525
        %v534 = vpack.c.bf16 %v526, %v526
        %v535 = vpack.c.bf16 %v527, %v527
        %v536 = vpack.c.bf16 %v528, %v528
        %v537 = vpack.c.bf16 %v529, %v529
        %v538 = vunpack.c.l.bf16 %v514
        %v539 = vunpack.c.l.bf16 %v515
        %v540 = vunpack.c.l.bf16 %v516
        %v541 = vunpack.c.l.bf16 %v517
        %v542 = vunpack.c.l.bf16 %v518
        %v543 = vunpack.c.l.bf16 %v519
        %v544 = vunpack.c.l.bf16 %v520
        %v545 = vunpack.c.l.bf16 %v521
        %v546 = vunpack.c.l.bf16 %v530
        %v547 = vunpack.c.l.bf16 %v531
        %v548 = vunpack.c.l.bf16 %v532
        %v549 = vunpack.c.l.bf16 %v533
        %v550 = vunpack.c.l.bf16 %v534
        %v551 = vunpack.c.l.bf16 %v535
        %v552 = vunpack.c.l.bf16 %v536
        %v553 = vunpack.c.l.bf16 %v537
        %v554 = vmul.f32 %v538, %v546
        %v555 = vmul.f32 %v539, %v547
        %v556 = vmul.f32 %v540, %v548
        %v557 = vmul.f32 %v541, %v549
        %v558 = vmul.f32 %v542, %v550
        %v559 = vmul.f32 %v543, %v551
        %v560 = vmul.f32 %v544, %v552
        %v561 = vmul.f32 %v545, %v553
        %v562 = vpack.c.bf16 %v554, %v554
        %v563 = vpack.c.bf16 %v555, %v555
        %v564 = vpack.c.bf16 %v556, %v556
        %v565 = vpack.c.bf16 %v557, %v557
        %v566 = vpack.c.bf16 %v558, %v558
        %v567 = vpack.c.bf16 %v559, %v559
        %v568 = vpack.c.bf16 %v560, %v560
        %v569 = vpack.c.bf16 %v561, %v561
        %v570 = vunpack.c.l.bf16 %v562
        %v571 = vunpack.c.l.bf16 %v563
        %v572 = vunpack.c.l.bf16 %v564
        %v573 = vunpack.c.l.bf16 %v565
        %v574 = vunpack.c.l.bf16 %v566
        %v575 = vunpack.c.l.bf16 %v567
        %v576 = vunpack.c.l.bf16 %v568
        %v577 = vunpack.c.l.bf16 %v569
        %v578 = vlog2.pop %v386
        %v579 = vmul.f32 %v578, 0.6931472
        %v580 = vlog2.pop %v387
        %v581 = vmul.f32 %v580, 0.6931472
        %v582 = vlog2.pop %v388
        %v583 = vmul.f32 %v582, 0.6931472
        %v584 = vlog2.pop %v389
        %v585 = vmul.f32 %v584, 0.6931472
        %v586 = vlog2.pop %v390
        %v587 = vmul.f32 %v586, 0.6931472
        %v588 = vlog2.pop %v391
        %v589 = vmul.f32 %v588, 0.6931472
        %v590 = vlog2.pop %v392
        %v591 = vmul.f32 %v590, 0.6931472
        %v592 = vlog2.pop %v393
        %v593 = vmul.f32 %v592, 0.6931472
        %v594 = vmul.f32 %v579, %v450
        %v595 = vmul.f32 %v581, %v451
        %v596 = vmul.f32 %v583, %v452
        %v597 = vmul.f32 %v585, %v453
        %v598 = vmul.f32 %v587, %v454
        %v599 = vmul.f32 %v589, %v455
        %v600 = vmul.f32 %v591, %v456
        %v601 = vmul.f32 %v593, %v457
        %v602 = vsub.f32 1.0, %v386
        %v603 = vsub.f32 1.0, %v387
        %v604 = vsub.f32 1.0, %v388
        %v605 = vsub.f32 1.0, %v389
        %v606 = vsub.f32 1.0, %v390
        %v607 = vsub.f32 1.0, %v391
        %v608 = vsub.f32 1.0, %v392
        %v609 = vsub.f32 1.0, %v393
        %v610 = vlog2.pop %v602
        %v611 = vmul.f32 %v610, 0.6931472
        %v612 = vlog2.pop %v603
        %v613 = vmul.f32 %v612, 0.6931472
        %v614 = vlog2.pop %v604
        %v615 = vmul.f32 %v614, 0.6931472
        %v616 = vlog2.pop %v605
        %v617 = vmul.f32 %v616, 0.6931472
        %v618 = vlog2.pop %v606
        %v619 = vmul.f32 %v618, 0.6931472
        %v620 = vlog2.pop %v607
        %v621 = vmul.f32 %v620, 0.6931472
        %v622 = vlog2.pop %v608
        %v623 = vmul.f32 %v622, 0.6931472
        %v624 = vlog2.pop %v609
        %v625 = vmul.f32 %v624, 0.6931472
        %v626 = vmul.f32 %v570, %v611
        %v627 = vmul.f32 %v571, %v613
        %v628 = vmul.f32 %v572, %v615
        %v629 = vmul.f32 %v573, %v617
        %v630 = vmul.f32 %v574, %v619
        %v631 = vmul.f32 %v575, %v621
        %v632 = vmul.f32 %v576, %v623
        %v633 = vmul.f32 %v577, %v625
        %v634 = vsel %vm402, %v594, %v626
        %v635 = vsel %vm403, %v595, %v627
        %v636 = vsel %vm404, %v596, %v628
        %v637 = vsel %vm405, %v597, %v629
        %v638 = vsel %vm406, %v598, %v630
        %v639 = vsel %vm407, %v599, %v631
        %v640 = vsel %vm408, %v600, %v632
        %v641 = vsel %vm409, %v601, %v633
        %v642 = vld [vmem:[#allocation2] sm:$0x1]
        %vm643 = vcmask 130048
        %v644 = vsel %vm643, %v634, 0.0
        %v645 = vsel %vm643, %v635, 0.0
        %v646 = vadd.f32 %v644, %v645
        %v647 = vsel %vm643, %v636, 0.0
        %v648 = vadd.f32 %v646, %v647
        %v649 = vsel %vm643, %v637, 0.0
        %v650 = vadd.f32 %v648, %v649
        %v651 = vsel %vm643, %v638, 0.0
        %v652 = vadd.f32 %v650, %v651
        %v653 = vsel %vm643, %v639, 0.0
        %v654 = vadd.f32 %v652, %v653
        %v655 = vsel %vm643, %v640, 0.0
        %v656 = vadd.f32 %v654, %v655
        %v657 = vsel %vm643, %v641, 0.0
        %v658 = vadd.f32 %v656, %v657
        %659 = vadd.xlane.f32.xlu0 %v658
        %v660 = vpop.xlane.xlu0 %659
        %v661 = vrot.slane %v660, 4
        %v662 = vadd.f32 %v660, %v661
        %v663 = vrot.slane %v662, 2
        %v664 = vadd.f32 %v662, %v663
        %v665 = vrot.slane %v664, 1
        %v666 = vadd.f32 %v664, %v665
        %s667 = vtos %v666
        %v668 = vstv %s667
        %v669 = vadd.f32 %v642, %v668
        %vm670 = vcmask 0
        %671 = vst.msk [vmem:[#allocation2] sm:$0x1] %vm670, %v669
        %v672 = vld [vmem:[#allocation3] sm:$0x1]
        %v673 = vsel %vm402, 1, 0
        %v674 = vsel %vm403, 1, 0
        %v675 = vsel %vm404, 1, 0
        %v676 = vsel %vm405, 1, 0
        %v677 = vsel %vm406, 1, 0
        %v678 = vsel %vm407, 1, 0
        %v679 = vsel %vm408, 1, 0
        %v680 = vsel %vm409, 1, 0
        %v681 = vcvt.s32.f32 %v673
        %v682 = vcvt.s32.f32 %v674
        %v683 = vcvt.s32.f32 %v675
        %v684 = vcvt.s32.f32 %v676
        %v685 = vcvt.s32.f32 %v677
        %v686 = vcvt.s32.f32 %v678
        %v687 = vcvt.s32.f32 %v679
        %v688 = vcvt.s32.f32 %v680
        %v689 = vsel %vm643, %v681, 0.0
        %v690 = vsel %vm643, %v682, 0.0
        %v691 = vadd.f32 %v689, %v690
        %v692 = vsel %vm643, %v683, 0.0
        %v693 = vadd.f32 %v691, %v692
        %v694 = vsel %vm643, %v684, 0.0
        %v695 = vadd.f32 %v693, %v694
        %v696 = vsel %vm643, %v685, 0.0
        %v697 = vadd.f32 %v695, %v696
        %v698 = vsel %vm643, %v686, 0.0
        %v699 = vadd.f32 %v697, %v698
        %v700 = vsel %vm643, %v687, 0.0
        %v701 = vadd.f32 %v699, %v700
        %v702 = vsel %vm643, %v688, 0.0
        %v703 = vadd.f32 %v701, %v702
        %704 = vadd.xlane.f32.xlu0 %v703
        %v705 = vpop.xlane.xlu0 %704
        %v706 = vrot.slane %v705, 4
        %v707 = vadd.f32 %v705, %v706
        %v708 = vrot.slane %v707, 2
        %v709 = vadd.f32 %v707, %v708
        %v710 = vrot.slane %v709, 1
        %v711 = vadd.f32 %v709, %v710
        %s712 = vtos %v711
        %v713 = vstv %s712
        %v714 = vadd.f32 %v672, %v713
        %715 = vst.msk [vmem:[#allocation3] sm:$0x1] %vm670, %v714
        // Predicated region
        $region53: #{tpu_custom_call.1} parent=35 // pred_check
          %p716 = pneg %p347
        $region54: #{tpu_custom_call.1} parent=35 // pred_check_branch
          %718 = sbr.rel (%p716) target = $region56
        $region55: #{tpu_custom_call.1} parent=35 // pred_region
          %s719 = sld [smem:[#allocation5 + %s34]]
          %s720 = scvt.s32.f32 %s719
          %v721 = vld [vmem:[#allocation3] sm:$0x1]
          %v722 = vld [vmem:[#allocation2] sm:$0x1]
          %v723 = vsub.f32 0.0, %v722
          %vm724 = vcmp.gt.f32.partialorder %v721, 0.0
          %v725 = vsel %vm724, %v721, 1.0
          %v726 = vrcp.pop %v725
          %v727 = vmul.f32 %v725, %v726
          %v728 = vsub.f32 1.0, %v727
          %v729 = vmul.f32 %v726, %v728
          %v730 = vadd.f32 %v726, %v729
          %vm731 = vweird.f32 %v725
          %vm732 = vweird.f32 %v726
          %vm733 = vmor %vm731, %vm732
          %v734 = vsel %vm733, %v726, %v730
          %v735 = vand.u32 2147483647, %v725
          %vm736 = vcmp.eq.f32.partialorder %v735, 8.507059e+37
          %v737 = vand.u32 %v725, 2147483648
          %v738 = vor.u32 1.1754944e-38, %v737
          %v739 = vsel %vm736, %v738, %v734
          %v740 = vmul.f32 %v723, %v739
          %v741 = vld [vmem:[%s343] sm:$0xff]
          %v742 = vcvt.f32.s32.to.zero.pseudo %v741
          %v743 = vlaneseq
          %v744 = vand.u32 %v743, 127
          %745 = vset.pattern.permute.xlu0 0
          %746 = vperm.xlu0 %745, %v742
          %v747 = vpop.permute.xlu0 %746
          %vm748 = vcmp.eq.s32.totalorder %v744, %v747
          %v749 = vsel %vm748, 1, 0
          %v750 = vcvt.s32.f32 %v749
          %v751 = vld [vmem:[%s300] sm:$0xff]
          %v752 = vld [vmem:[%s300 + $0x8] sm:$0xff]
          %v754 = vsel %vm643, %v750, 0
          %756 = vmatpush.msra.mxu0 0.0
          %757 = vmatpush.msra.mxu0 0.0
          %758 = vmatpush.msra.mxu0 0.0
          %759 = vmatpush.msra.mxu0 0.0
          %760 = vmatpush.msra.mxu0 0.0
          %761 = vmatpush.msra.mxu0 0.0
          %762 = vmatpush.msra.mxu0 0.0
          %763 = vmatpush.msra.mxu0 0.0
          %764 = vmatpush.msra.mxu0 0.0
          %765 = vmatpush.msra.mxu0 0.0
          %766 = vmatpush.msra.mxu0 0.0
          %767 = vmatpush.msra.mxu0 0.0
          %768 = vmatpush.msra.mxu0 0.0
          %769 = vmatpush.msra.mxu0 0.0
          %770 = vmatpush.msra.mxu0 %v752
          %771 = vmatpush.msra.mxu0 %v751
          %772 = vmatmul.f32.gmra.mxu0 %v754
          %v773 = vpop.f32.mrf.mxu0
          %v774 = vadd.f32 0.0, %v773
          %775 = vdwg.mxu0
          %776 = vset.pattern.permute.xlu0 1
          %777 = vperm.xlu0 %776, %v742
          %v778 = vpop.permute.xlu0 %777
          %vm779 = vcmp.eq.s32.totalorder %v744, %v778
          %v780 = vsel %vm779, 1, 0
          %v781 = vcvt.s32.f32 %v780
          %783 = vrot.lane.b32.xlu0 %v781, 16
          %v784 = vpop.permute.xlu0 %783
          %786 = vrot.lane.b32.xlu0 %v781, 32
          %v787 = vpop.permute.xlu0 %786
          %789 = vrot.lane.b32.xlu0 %v781, 48
          %v790 = vpop.permute.xlu0 %789
          %v792 = vsel %vm643, %v781, %v784
          %vm793 = vcmask 261120
          %v794 = vsel %vm793, %v792, %v787
          %vm795 = vcmask 392192
          %v796 = vsel %vm795, %v794, %v790
          %v797 = vmul.f32 %v774, %v796
          %v798 = vlaneseq
          %v799 = vshrl.u32 %v798, 7
          %v800 = vadd.s32 %v799, 8
          %v801 = vadd.s32 %v799, 16
          %v802 = vadd.s32 %v799, 24
          %v803 = vadd.s32 %v799, 32
          %v804 = vadd.s32 %v799, 40
          %v805 = vadd.s32 %v799, 48
          %v806 = vadd.s32 %v799, 56
          %v807 = vmul.u32 %v744, 16
          %vm808 = vcmp.ge.s32.totalorder %v799, %v807
          %vm809 = vcmp.ge.s32.totalorder %v800, %v807
          %vm810 = vcmp.ge.s32.totalorder %v801, %v807
          %vm811 = vcmp.ge.s32.totalorder %v802, %v807
          %vm812 = vcmp.ge.s32.totalorder %v803, %v807
          %vm813 = vcmp.ge.s32.totalorder %v804, %v807
          %vm814 = vcmp.ge.s32.totalorder %v805, %v807
          %vm815 = vcmp.ge.s32.totalorder %v806, %v807
          %v816 = vadd.s32 %v744, 1
          %v817 = vmul.u32 %v816, 16
          %vm818 = vcmp.lt.s32.totalorder %v799, %v817
          %vm819 = vcmp.lt.s32.totalorder %v800, %v817
          %vm820 = vcmp.lt.s32.totalorder %v801, %v817
          %vm821 = vcmp.lt.s32.totalorder %v802, %v817
          %vm822 = vcmp.lt.s32.totalorder %v803, %v817
          %vm823 = vcmp.lt.s32.totalorder %v804, %v817
          %vm824 = vcmp.lt.s32.totalorder %v805, %v817
          %vm825 = vcmp.lt.s32.totalorder %v806, %v817
          %vm826 = vmand %vm808, %vm818
          %vm827 = vmand %vm809, %vm819
          %vm828 = vmand %vm810, %vm820
          %vm829 = vmand %vm811, %vm821
          %vm830 = vmand %vm812, %vm822
          %vm831 = vmand %vm813, %vm823
          %vm832 = vmand %vm814, %vm824
          %vm833 = vmand %vm815, %vm825
          %v834 = vsel %vm826, 1, 0
          %v835 = vsel %vm827, 1, 0
          %v836 = vsel %vm828, 1, 0
          %v837 = vsel %vm829, 1, 0
          %v838 = vsel %vm830, 1, 0
          %v839 = vsel %vm831, 1, 0
          %v840 = vsel %vm832, 1, 0
          %v841 = vsel %vm833, 1, 0
          %v842 = vcvt.s32.f32 %v834
          %v843 = vcvt.s32.f32 %v835
          %v844 = vcvt.s32.f32 %v836
          %v845 = vcvt.s32.f32 %v837
          %v846 = vcvt.s32.f32 %v838
          %v847 = vcvt.s32.f32 %v839
          %v848 = vcvt.s32.f32 %v840
          %v849 = vcvt.s32.f32 %v841
          %vm850 = vcmask 523264
          %v852 = vsel %vm850, %v797, 0
          %854 = vmatpush.msra.mxu0 0.0
          %855 = vmatpush.msra.mxu0 0.0
          %856 = vmatpush.msra.mxu0 0.0
          %857 = vmatpush.msra.mxu0 0.0
          %858 = vmatpush.msra.mxu0 0.0
          %859 = vmatpush.msra.mxu0 0.0
          %860 = vmatpush.msra.mxu0 0.0
          %861 = vmatpush.msra.mxu0 0.0
          %862 = vmatpush.msra.mxu0 %v849
          %863 = vmatpush.msra.mxu0 %v848
          %864 = vmatpush.msra.mxu0 %v847
          %865 = vmatpush.msra.mxu0 %v846
          %866 = vmatpush.msra.mxu0 %v845
          %867 = vmatpush.msra.mxu0 %v844
          %868 = vmatpush.msra.mxu0 %v843
          %869 = vmatpush.msra.mxu0 %v842
          %870 = vmatmul.f32.gmra.mxu0 %v852
          %v871 = vpop.f32.mrf.mxu0
          %v872 = vadd.f32 0.0, %v871
          %873 = vdwg.mxu0
          %v874 = vstv %s719
          %vm875 = vcmp.lt.s32.totalorder %v799, %v874
          %v876 = vsel %vm875, 1, 0
          %v877 = vcvt.s32.f32 %v876
          %879 = vrot.lane.b32.xlu0 %v741, 126
          %v880 = vpop.permute.xlu0 %879
          %v882 = vsub.f32 %v872, %v880
          %v883 = vand.u32 2147483647, %v882
          %v884 = vmul.f32 %v883, %v877
          %vm885 = vcmask 31744
          %v886 = vsel %vm885, %v884, 0.0
          %887 = vadd.xlane.f32.xlu0 %v886
          %v888 = vpop.xlane.xlu0 %887
          %v889 = vrot.slane %v888, 4
          %v890 = vadd.f32 %v888, %v889
          %v891 = vrot.slane %v890, 2
          %v892 = vadd.f32 %v890, %v891
          %v893 = vrot.slane %v892, 1
          %v894 = vadd.f32 %v892, %v893
          %s895 = vtos %v894
          %v896 = vstv %s895
          %s897 = smul.f32 %s720, 2.0
          %s898 = smax.f32 %s897, 1.0
          %v899 = vstv %s898
          %v900 = vrcp.pop %v899
          %v901 = vmul.f32 %v899, %v900
          %v902 = vsub.f32 1.0, %v901
          %v903 = vmul.f32 %v900, %v902
          %v904 = vadd.f32 %v900, %v903
          %vm905 = vweird.f32 %v899
          %vm906 = vweird.f32 %v900
          %vm907 = vmor %vm905, %vm906
          %v908 = vsel %vm907, %v900, %v904
          %v909 = vand.u32 2147483647, %v899
          %vm910 = vcmp.eq.f32.partialorder %v909, 8.507059e+37
          %v911 = vand.u32 %v899, 2147483648
          %v912 = vor.u32 1.1754944e-38, %v911
          %v913 = vsel %vm910, %v912, %v908
          %v914 = vmul.f32 %v896, %v913
          %v915 = vadd.f32 %v740, %v914
          %p916 = scmp.gt.s32.totalorder %s719, 0
          %s917 = scalar_select %p916, 1, 0
          %v918 = vstv %s917
          %vm919 = vcmp.eq.s32.totalorder %v918, 1
          %v920 = vsel %vm919, %v915, 0.0
          %921 = vst.msk [vmem:[%s346] sm:$0x1] %vm670, %v920
        $region56: #{tpu_custom_call.1} parent=35 // pred_fallthru
          _
        %p922 = scmp.lt.s32.totalorder %s34, 1
        %s923 = scalar_select %p922, %s34, 1
        %s924 = scalar_lea.vmem %s5, %s923
        // Predicated region
        $region57: #{tpu_custom_call.1} parent=35 // pred_check
          %p925 = pneg %p168
        $region58: #{tpu_custom_call.1} parent=35 // pred_check_branch
          %927 = sbr.rel (%p925) target = $region60
        $region59: #{tpu_custom_call.1} parent=35 // pred_region
          _
        $region60: #{tpu_custom_call.1} parent=35 // pred_fallthru
          _
      $region36: #{tpu_custom_call.1} parent=5 // pred_fallthru
        _
      %p928 = scmp.le.s32.totalorder 2, %s25
      // Predicated region
      $region61: #{tpu_custom_call.1} parent=5 // pred_check
        %p929 = pneg %p928
      $region62: #{tpu_custom_call.1} parent=5 // pred_check_branch
        %931 = sbr.rel (%p929) target = $region64
      $region63: #{tpu_custom_call.1} parent=5 // pred_region
        %s932 = ssub.s32 %s25, 2
        // Predicated region
        $region65: #{tpu_custom_call.1} parent=63 // pred_check
          %p933 = pneg %p174
        $region66: #{tpu_custom_call.1} parent=63 // pred_check_branch
          %935 = sbr.rel (%p933) target = $region68
        $region67: #{tpu_custom_call.1} parent=63 // pred_region
          %p936 = scmp.lt.s32.totalorder %s36, 1
          %s937 = scalar_select %p936, %s36, 1
          %s938 = scalar_lea.vmem %s5, %s937
        $region68: #{tpu_custom_call.1} parent=63 // pred_fallthru
          _
      $region64: #{tpu_custom_call.1} parent=5 // pred_fallthru
        _
    $region6: #{tpu_custom_call.1} parent=1 // loop_footer
      %s29 = sadd.s32 1, %s25
    $region7: #{tpu_custom_call.1} parent=1 // loop_footer_branch
      %24 = sbr.rel target = $region3
    $region8: #{tpu_custom_call.1} parent=1 // loop_exit
      _
    %939 = vsyncpa [#allocation7], 1
    %s940 = scalar_lea.sflag [#allocation7], 1
    %941 = vsyncpa %s940, 1
    %942 = vsyncpa [#allocation9], 1
    %s943 = scalar_lea.sflag [#allocation9], 1
    %944 = vsyncpa %s943, 1

</llo_original>
